<compile_context>
chip_gen: v7x
topology: tpu7x:2x2x1
jax: 0.10.0
libtpu: 0.0.40
codegen_flags: <defaults>
</compile_context>

<pallas_src>
import jax
import jax.numpy as jnp
from jax.experimental import pallas as pl
from jax.experimental.pallas import tpu as pltpu


def _round_up(x, n):
    return ((x + n - 1) // n) * n


def _choose_m_tiling(m, tile_cap=1024):
    """M padding / tile size / grid size.

    Single tile for small M (no per-step pipeline overhead on single-TC
    v5e/v6e and no pointless split on v7x); for large M, tiles of <=1024 rows
    that divide the padded M exactly (v7x megacore shards the parallel axis).
    """
    m_aligned = _round_up(m, 16)                 # bf16 sublane alignment
    if m_aligned <= tile_cap:
        return m_aligned, m_aligned, 1
    grid_m = pl.cdiv(m_aligned, tile_cap)
    tm = _round_up(pl.cdiv(m_aligned, grid_m), 16)
    return tm * grid_m, tm, grid_m


# ----------------------------------------------------------------------------
# Pallas kernel: fused (patches @ W_scaled) + bias, then ReLU.
#   p_ref : (tm, Kp)      bf16 patch tile (K zero-padded to 128 multiple)
#   w_ref : (Kp, OCp)     bf16 weights (BN scale pre-folded, K/OC zero-padded)
#   b_ref : (1, OCp)      f32  folded bias (beta + scale*(b_conv - mean))
#   o_ref : (tm, OCp)     bf16 output tile (lane-dense, full 128-lane stores)
# f32 accumulation on the MXU + f32 epilogue; bf16 only at the HBM boundary.
# ----------------------------------------------------------------------------
def _mm_bias_relu_kernel(p_ref, w_ref, b_ref, o_ref):
    acc = jnp.dot(p_ref[...], w_ref[...], preferred_element_type=jnp.float32)
    o_ref[...] = jnp.maximum(acc + b_ref[...], 0.0).astype(o_ref.dtype)


# ----------------------------------------------------------------------------
# Glue: im2col patch extraction on an (already bf16) NHWC input.
# Produces (N*OH*OW, KH*KW*C) rows whose column order matches a weight matrix
# flattened as (KH, KW, C, OC).  C stays the fastest-varying (lane) axis.
# ----------------------------------------------------------------------------
def _im2col_nhwc(x, kh, kw, stride, pad):
    n, h, w, c = x.shape
    oh = (h + 2 * pad - kh) // stride + 1
    ow = (w + 2 * pad - kw) // stride + 1
    xp = jnp.pad(x, ((0, 0), (pad, pad), (pad, pad), (0, 0)))
    cols = []
    for i in range(kh):
        for j in range(kw):
            cols.append(xp[:, i:i + stride * oh:stride, j:j + stride * ow:stride, :])
    patches = jnp.stack(cols, axis=3).reshape(n * oh * ow, kh * kw * c)
    return patches, oh, ow


# ----------------------------------------------------------------------------
# One Conv2d + BatchNorm2d(eval) + ReLU stage; bf16 NHWC in, bf16 NHWC out.
# ----------------------------------------------------------------------------
def conv_bn_relu_stage(x_nhwc, w, b_conv, gamma, beta, mean, var,
                       stride, pad, eps=1e-5):
    n = x_nhwc.shape[0]
    c = x_nhwc.shape[3]
    oc, _, kh, kw = w.shape
    k = c * kh * kw

    patches, oh, ow = _im2col_nhwc(x_nhwc, kh, kw, stride, pad)   # (M, K) bf16
    m = patches.shape[0]

    # Fold BN (running stats) + conv bias into per-channel scale/bias, then
    # fold the scale into the weight columns so the kernel is dot+bias+relu.
    scale = gamma / jnp.sqrt(var + eps)                            # (OC,)
    bias = beta + scale * (b_conv - mean)                          # (OC,)
    w2d = w.transpose(2, 3, 1, 0).reshape(k, oc) * scale[None, :]  # (K, OC) f32

    # Alignment padding: OC -> 128-lane multiple (unmasked output stores),
    # K -> 128 multiple (aligned MXU operands), M -> 16 multiple.
    oc_pad = _round_up(oc, 128)
    kp = _round_up(k, 128)
    m_pad, tm, grid_m = _choose_m_tiling(m)

    if (kp, oc_pad) != (k, oc):
        w2d = jnp.pad(w2d, ((0, kp - k), (0, oc_pad - oc)))
    if oc_pad != oc:
        bias = jnp.pad(bias, (0, oc_pad - oc))
    if (m_pad, kp) != (m, k):
        patches = jnp.pad(patches, ((0, m_pad - m), (0, kp - k)))

    # Weight / bias are grid-invariant: when the grid actually pipelines over
    # M, a single buffer is enough (saves dead double-buffer VMEM on v7x).
    if grid_m > 1:
        w_spec = pl.BlockSpec((kp, oc_pad), lambda i: (0, 0),
                              pipeline_mode=pl.Buffered(1))
        b_spec = pl.BlockSpec((1, oc_pad), lambda i: (0, 0),
                              pipeline_mode=pl.Buffered(1))
    else:
        w_spec = pl.BlockSpec((kp, oc_pad), lambda i: (0, 0))
        b_spec = pl.BlockSpec((1, oc_pad), lambda i: (0, 0))

    out = pl.pallas_call(
        _mm_bias_relu_kernel,
        out_shape=jax.ShapeDtypeStruct((m_pad, oc_pad), jnp.bfloat16),
        grid=(grid_m,),
        in_specs=[
            pl.BlockSpec((tm, kp), lambda i: (i, 0)),
            w_spec,
            b_spec,
        ],
        out_specs=pl.BlockSpec((tm, oc_pad), lambda i: (i, 0)),
        compiler_params=pltpu.CompilerParams(
            dimension_semantics=("parallel",),
            vmem_limit_bytes=32 * 1024 * 1024),
    )(patches,                                   # already bf16 (no extra cast pass)
      w2d.astype(jnp.bfloat16),
      bias[None, :].astype(jnp.float32))

    # Slice valid rows/channels; stay bf16 NHWC for the next stage.
    return out[:m, :oc].reshape(n, oh, ow, oc)


# ----------------------------------------------------------------------------
# Parameter initialization (deterministic; mirrors the module's __init__ shapes)
# ----------------------------------------------------------------------------
def init_params(key, in_channels, base_channels=8, num_scales=3):
    params = []
    c_in = in_channels
    c_out = base_channels * 2
    k, stride, pad = 7, 4, 3          # init_conv: Conv2d(.., k=7, s=4, p=3)
    for _ in range(num_scales):
        key, kw_, kb_, kg_, kbt_, km_, kv_ = jax.random.split(key, 7)
        fan_in = c_in * k * k
        params.append(dict(
            w=jax.random.normal(kw_, (c_out, c_in, k, k), jnp.float32) / jnp.sqrt(fan_in),
            b=0.01 * jax.random.normal(kb_, (c_out,), jnp.float32),
            gamma=1.0 + 0.1 * jax.random.normal(kg_, (c_out,), jnp.float32),
            beta=0.1 * jax.random.normal(kbt_, (c_out,), jnp.float32),
            mean=0.1 * jax.random.normal(km_, (c_out,), jnp.float32),
            var=1.0 + 0.1 * jnp.abs(jax.random.normal(kv_, (c_out,), jnp.float32)),
            stride=stride, pad=pad,
        ))
        c_in = c_out
        c_out *= 2
        k, stride, pad = 3, 2, 1      # scale blocks: Conv2d(.., k=3, s=2, p=1)
    return params


def vision_processor_forward(x_nchw, params, features_nchw=True):
    """Returns the list of multi-scale features (NCHW f32), like the PyTorch module.

    Pass features_nchw=False if the consumer can take NHWC directly (skips the
    per-scale transpose HBM round trip).
    """
    # NCHW -> NHWC once, cast to bf16 once: im2col and all inter-stage
    # activations live in bf16, halving every HBM round trip.
    x = jnp.transpose(x_nchw, (0, 2, 3, 1)).astype(jnp.bfloat16)
    features = []
    for p in params:
        x = conv_bn_relu_stage(x, p["w"], p["b"], p["gamma"], p["beta"],
                               p["mean"], p["var"], p["stride"], p["pad"])
        if features_nchw:
            feat = jnp.transpose(x, (0, 3, 1, 2))    # small sliced view only
        else:
            feat = x
        features.append(feat.astype(jnp.float32))    # PyTorch returns f32
    return features


# ----------------------------------------------------------------------------
# Pure-JAX reference (lax.conv, f32) for a correctness sanity check.
# ----------------------------------------------------------------------------
def _ref_stage(x, p, eps=1e-5):
    y = jax.lax.conv_general_dilated(
        x, p["w"], (p["stride"], p["stride"]),
        [(p["pad"], p["pad"]), (p["pad"], p["pad"])],
        dimension_numbers=("NCHW", "OIHW", "NCHW"))
    y = y + p["b"][None, :, None, None]
    s = (p["gamma"] / jnp.sqrt(p["var"] + eps))[None, :, None, None]
    y = (y - p["mean"][None, :, None, None]) * s + p["beta"][None, :, None, None]
    return jnp.maximum(y, 0.0)


def _ref_forward(x, params):
    feats = []
    for p in params:
        x = _ref_stage(x, p)
        feats.append(x)
    return feats


if __name__ == "__main__":
    key = jax.random.PRNGKey(0)
    key, kx = jax.random.split(key)

    in_channels, base_channels, num_scales = 4, 8, 3
    x = jax.random.normal(kx, (2, in_channels, 32, 32), jnp.float32)   # NCHW

    params = init_params(key, in_channels, base_channels, num_scales)

    fwd = jax.jit(lambda inp: vision_processor_forward(inp, params))
    feats = fwd(x)
    jax.block_until_ready(feats)

    # Sanity check vs pure-JAX f32 reference.  Tolerances are loose because
    # MXU operands AND inter-stage activations are bf16 by design.
    ref_feats = _ref_forward(x, params)
    for f, r in zip(feats, ref_feats):
        assert f.shape == r.shape, (f.shape, r.shape)
        assert jnp.allclose(f, r, rtol=3e-2, atol=1e-1), \
            f"mismatch: max abs diff {jnp.max(jnp.abs(f - r))}"

    print("KERNEL_OK")
</pallas_src>

<mosaic_0001>
module attributes {stable_mosaic.version = 11 : i64} {
  func.func @_mm_bias_relu_kernel(%arg0: i32, %arg1: memref<128x256xbf16, #tpu.memory_space<vmem>>, %arg2: memref<256x128xbf16, #tpu.memory_space<vmem>>, %arg3: memref<1x128xf32, #tpu.memory_space<vmem>>, %arg4: memref<128x128xbf16, #tpu.memory_space<vmem>>) attributes {dimension_semantics = [#tpu.dimension_semantics<parallel>], iteration_bounds = array<i64: 1>, scalar_prefetch = 0 : i64, scratch_operands = 0 : i64, tpu.core_type = #tpu.core_type<tc>, window_params = [{transform_indices = @transform_0, window_bounds = array<i64: 128, 256>}, {pipeline_mode = #tpu.pipeline_mode<synchronous>, transform_indices = @transform_1, window_bounds = array<i64: 256, 128>}, {pipeline_mode = #tpu.pipeline_mode<synchronous>, transform_indices = @transform_2, window_bounds = array<i64: 1, 128>}, {transform_indices = @transform_3, window_bounds = array<i64: 128, 128>}]} {
    %c0 = arith.constant 0 : index
    %c0_0 = arith.constant 0 : index
    %0 = vector.load %arg1[%c0, %c0_0] : memref<128x256xbf16, #tpu.memory_space<vmem>>, vector<128x256xbf16>
    %c0_1 = arith.constant 0 : index
    %c0_2 = arith.constant 0 : index
    %1 = vector.load %arg2[%c0_1, %c0_2] : memref<256x128xbf16, #tpu.memory_space<vmem>>, vector<256x128xbf16>
    %cst = arith.constant dense<0.000000e+00> : vector<128x128xf32>
    %2 = tpu.matmul %0, %1, %cst {dimension_numbers = #tpu.dot_dimension_numbers<[1], [0], [0], [1], [0, 0, 1, 1], [], []>} : vector<128x256xbf16>, vector<256x128xbf16>, vector<128x128xf32> -> vector<128x128xf32>
    %c0_3 = arith.constant 0 : index
    %c0_4 = arith.constant 0 : index
    %3 = vector.load %arg3[%c0_3, %c0_4] : memref<1x128xf32, #tpu.memory_space<vmem>>, vector<1x128xf32>
    %4 = vector.broadcast %3 : vector<1x128xf32> to vector<128x128xf32>
    %5 = arith.addf %2, %4 : vector<128x128xf32>
    %cst_5 = arith.constant 0.000000e+00 : f32
    %6 = vector.broadcast %cst_5 : f32 to vector<128x128xf32>
    %7 = arith.maximumf %5, %6 : vector<128x128xf32>
    %8 = arith.truncf %7 : vector<128x128xf32> to vector<128x128xbf16>
    %c0_6 = arith.constant 0 : index
    %c0_7 = arith.constant 0 : index
    %9 = vector.load %arg4[%c0_6, %c0_7] : memref<128x128xbf16, #tpu.memory_space<vmem>>, vector<128x128xbf16>
    tpu.vector_store %arg4[%c0_6, %c0_7], %8 {strides = array<i32>} : memref<128x128xbf16, #tpu.memory_space<vmem>>, vector<128x128xbf16>,
    return
  }
  func.func @transform_0(%arg0: i32) -> (i32, i32) {
    %c0_i32 = arith.constant 0 : i32
    %c0_i32_0 = arith.constant 0 : i32
    return %arg0, %c0_i32 : i32, i32
  }
  func.func @transform_1(%arg0: i32) -> (i32, i32) {
    %c0_i32 = arith.constant 0 : i32
    %c0_i32_0 = arith.constant 0 : i32
    %c0_i32_1 = arith.constant 0 : i32
    return %c0_i32, %c0_i32_0 : i32, i32
  }
  func.func @transform_2(%arg0: i32) -> (i32, i32) {
    %c0_i32 = arith.constant 0 : i32
    %c0_i32_0 = arith.constant 0 : i32
    %c0_i32_1 = arith.constant 0 : i32
    return %c0_i32, %c0_i32_0 : i32, i32
  }
  func.func @transform_3(%arg0: i32) -> (i32, i32) {
    %c0_i32 = arith.constant 0 : i32
    %c0_i32_0 = arith.constant 0 : i32
    return %arg0, %c0_i32 : i32, i32
  }
}

module attributes {stable_mosaic.version = 11 : i64} {
  func.func @_mm_bias_relu_kernel(%arg0: i32, %arg1: memref<32x256xbf16, #tpu.memory_space<vmem>>, %arg2: memref<256x128xbf16, #tpu.memory_space<vmem>>, %arg3: memref<1x128xf32, #tpu.memory_space<vmem>>, %arg4: memref<32x128xbf16, #tpu.memory_space<vmem>>) attributes {dimension_semantics = [#tpu.dimension_semantics<parallel>], iteration_bounds = array<i64: 1>, scalar_prefetch = 0 : i64, scratch_operands = 0 : i64, tpu.core_type = #tpu.core_type<tc>, window_params = [{transform_indices = @transform_0, window_bounds = array<i64: 32, 256>}, {pipeline_mode = #tpu.pipeline_mode<synchronous>, transform_indices = @transform_1, window_bounds = array<i64: 256, 128>}, {pipeline_mode = #tpu.pipeline_mode<synchronous>, transform_indices = @transform_2, window_bounds = array<i64: 1, 128>}, {transform_indices = @transform_3, window_bounds = array<i64: 32, 128>}]} {
    %c0 = arith.constant 0 : index
    %c0_0 = arith.constant 0 : index
    %0 = vector.load %arg1[%c0, %c0_0] : memref<32x256xbf16, #tpu.memory_space<vmem>>, vector<32x256xbf16>
    %c0_1 = arith.constant 0 : index
    %c0_2 = arith.constant 0 : index
    %1 = vector.load %arg2[%c0_1, %c0_2] : memref<256x128xbf16, #tpu.memory_space<vmem>>, vector<256x128xbf16>
    %cst = arith.constant dense<0.000000e+00> : vector<32x128xf32>
    %2 = tpu.matmul %0, %1, %cst {dimension_numbers = #tpu.dot_dimension_numbers<[1], [0], [0], [1], [0, 0, 1, 1], [], []>} : vector<32x256xbf16>, vector<256x128xbf16>, vector<32x128xf32> -> vector<32x128xf32>
    %c0_3 = arith.constant 0 : index
    %c0_4 = arith.constant 0 : index
    %3 = vector.load %arg3[%c0_3, %c0_4] : memref<1x128xf32, #tpu.memory_space<vmem>>, vector<1x128xf32>
    %4 = vector.broadcast %3 : vector<1x128xf32> to vector<32x128xf32>
    %5 = arith.addf %2, %4 : vector<32x128xf32>
    %cst_5 = arith.constant 0.000000e+00 : f32
    %6 = vector.broadcast %cst_5 : f32 to vector<32x128xf32>
    %7 = arith.maximumf %5, %6 : vector<32x128xf32>
    %8 = arith.truncf %7 : vector<32x128xf32> to vector<32x128xbf16>
    %c0_6 = arith.constant 0 : index
    %c0_7 = arith.constant 0 : index
    %9 = vector.load %arg4[%c0_6, %c0_7] : memref<32x128xbf16, #tpu.memory_space<vmem>>, vector<32x128xbf16>
    tpu.vector_store %arg4[%c0_6, %c0_7], %8 {strides = array<i32>} : memref<32x128xbf16, #tpu.memory_space<vmem>>, vector<32x128xbf16>,
    return
  }
  func.func @transform_0(%arg0: i32) -> (i32, i32) {
    %c0_i32 = arith.constant 0 : i32
    %c0_i32_0 = arith.constant 0 : i32
    return %arg0, %c0_i32 : i32, i32
  }
  func.func @transform_1(%arg0: i32) -> (i32, i32) {
    %c0_i32 = arith.constant 0 : i32
    %c0_i32_0 = arith.constant 0 : i32
    %c0_i32_1 = arith.constant 0 : i32
    return %c0_i32, %c0_i32_0 : i32, i32
  }
  func.func @transform_2(%arg0: i32) -> (i32, i32) {
    %c0_i32 = arith.constant 0 : i32
    %c0_i32_0 = arith.constant 0 : i32
    %c0_i32_1 = arith.constant 0 : i32
    return %c0_i32, %c0_i32_0 : i32, i32
  }
  func.func @transform_3(%arg0: i32) -> (i32, i32) {
    %c0_i32 = arith.constant 0 : i32
    %c0_i32_0 = arith.constant 0 : i32
    return %arg0, %c0_i32 : i32, i32
  }
}

module attributes {stable_mosaic.version = 11 : i64} {
  func.func @_mm_bias_relu_kernel(%arg0: i32, %arg1: memref<16x384xbf16, #tpu.memory_space<vmem>>, %arg2: memref<384x128xbf16, #tpu.memory_space<vmem>>, %arg3: memref<1x128xf32, #tpu.memory_space<vmem>>, %arg4: memref<16x128xbf16, #tpu.memory_space<vmem>>) attributes {dimension_semantics = [#tpu.dimension_semantics<parallel>], iteration_bounds = array<i64: 1>, scalar_prefetch = 0 : i64, scratch_operands = 0 : i64, tpu.core_type = #tpu.core_type<tc>, window_params = [{transform_indices = @transform_0, window_bounds = array<i64: 16, 384>}, {pipeline_mode = #tpu.pipeline_mode<synchronous>, transform_indices = @transform_1, window_bounds = array<i64: 384, 128>}, {pipeline_mode = #tpu.pipeline_mode<synchronous>, transform_indices = @transform_2, window_bounds = array<i64: 1, 128>}, {transform_indices = @transform_3, window_bounds = array<i64: 16, 128>}]} {
    %c0 = arith.constant 0 : index
    %c0_0 = arith.constant 0 : index
    %0 = vector.load %arg1[%c0, %c0_0] : memref<16x384xbf16, #tpu.memory_space<vmem>>, vector<16x384xbf16>
    %c0_1 = arith.constant 0 : index
    %c0_2 = arith.constant 0 : index
    %1 = vector.load %arg2[%c0_1, %c0_2] : memref<384x128xbf16, #tpu.memory_space<vmem>>, vector<384x128xbf16>
    %cst = arith.constant dense<0.000000e+00> : vector<16x128xf32>
    %2 = tpu.matmul %0, %1, %cst {dimension_numbers = #tpu.dot_dimension_numbers<[1], [0], [0], [1], [0, 0, 1, 1], [], []>} : vector<16x384xbf16>, vector<384x128xbf16>, vector<16x128xf32> -> vector<16x128xf32>
    %c0_3 = arith.constant 0 : index
    %c0_4 = arith.constant 0 : index
    %3 = vector.load %arg3[%c0_3, %c0_4] : memref<1x128xf32, #tpu.memory_space<vmem>>, vector<1x128xf32>
    %4 = vector.broadcast %3 : vector<1x128xf32> to vector<16x128xf32>
    %5 = arith.addf %2, %4 : vector<16x128xf32>
    %cst_5 = arith.constant 0.000000e+00 : f32
    %6 = vector.broadcast %cst_5 : f32 to vector<16x128xf32>
    %7 = arith.maximumf %5, %6 : vector<16x128xf32>
    %8 = arith.truncf %7 : vector<16x128xf32> to vector<16x128xbf16>
    %c0_6 = arith.constant 0 : index
    %c0_7 = arith.constant 0 : index
    %9 = vector.load %arg4[%c0_6, %c0_7] : memref<16x128xbf16, #tpu.memory_space<vmem>>, vector<16x128xbf16>
    tpu.vector_store %arg4[%c0_6, %c0_7], %8 {strides = array<i32>} : memref<16x128xbf16, #tpu.memory_space<vmem>>, vector<16x128xbf16>,
    return
  }
  func.func @transform_0(%arg0: i32) -> (i32, i32) {
    %c0_i32 = arith.constant 0 : i32
    %c0_i32_0 = arith.constant 0 : i32
    return %arg0, %c0_i32 : i32, i32
  }
  func.func @transform_1(%arg0: i32) -> (i32, i32) {
    %c0_i32 = arith.constant 0 : i32
    %c0_i32_0 = arith.constant 0 : i32
    %c0_i32_1 = arith.constant 0 : i32
    return %c0_i32, %c0_i32_0 : i32, i32
  }
  func.func @transform_2(%arg0: i32) -> (i32, i32) {
    %c0_i32 = arith.constant 0 : i32
    %c0_i32_0 = arith.constant 0 : i32
    %c0_i32_1 = arith.constant 0 : i32
    return %c0_i32, %c0_i32_0 : i32, i32
  }
  func.func @transform_3(%arg0: i32) -> (i32, i32) {
    %c0_i32 = arith.constant 0 : i32
    %c0_i32_0 = arith.constant 0 : i32
    return %arg0, %c0_i32 : i32, i32
  }
}

</mosaic_0001>

<llo_original>
// kernel: _lambda_.3
$region0: #{_lambda_.3}
  #allocation0 [shape = 'u32[]', space=smem, size = 0x4, offset = 0x4, fixed_abs, tag = 'smem constant byte address 0x4 - core index']
  #allocation1 [shape = 'u32[144,128]{1,0:T(1,128)}', space=vmem, size = 0x12000, scoped, tag = 'internal scratch']
  %s0 = inlined_call_operand.vmem [shape: bf16[128,256], index: 0, kind: input, shape index: {}]
  %s1 = inlined_call_operand.vmem [shape: bf16[256,128], index: 1, kind: input, shape index: {}]
  %s2 = inlined_call_operand.vmem [shape: f32[1,128], index: 2, kind: input, shape index: {}]
  %s3 = inlined_call_operand.vmem [shape: bf16[128,128], index: 3, kind: output, shape index: {}]
  %s4 = sld [smem:[#allocation0]]
  $region22: #{_lambda_.3} parent=0
    _
  %s6 = ssub.s32 1, %s4
  %s7 = scalar_select 0, %s6, %s4
  // Predicated region
  $region2: #{_lambda_.3} parent=0 // pred_check
    _
  $region3: #{_lambda_.3} parent=0 // pred_check_branch
    %9 = sbr.rel (0) target = $region5
  $region4: #{_lambda_.3} parent=0 // pred_region
    _
  $region5: #{_lambda_.3} parent=0 // pred_fallthru
    _
  // Predicated region
  $region6: #{_lambda_.3} parent=0 // pred_check
    _
  $region7: #{_lambda_.3} parent=0 // pred_check_branch
    %11 = sbr.rel (0) target = $region9
  $region8: #{_lambda_.3} parent=0 // pred_region
    _
  $region9: #{_lambda_.3} parent=0 // pred_fallthru
    _
  // Predicated region
  $region10: #{_lambda_.3} parent=0 // pred_check
    _
  $region11: #{_lambda_.3} parent=0 // pred_check_branch
    %13 = sbr.rel (0) target = $region13
  $region12: #{_lambda_.3} parent=0 // pred_region
    _
  $region13: #{_lambda_.3} parent=0 // pred_fallthru
    _
  %v15 = vld [vmem:[%s0] sm:$0xff]
  %v16 = vld [vmem:[%s0 + $0x8] sm:$0xff]
  %v17 = vld [vmem:[%s0 + $0x10] sm:$0xff]
  %v18 = vld [vmem:[%s0 + $0x18] sm:$0xff]
  %v19 = vld [vmem:[%s0 + $0x20] sm:$0xff]
  %v20 = vld [vmem:[%s0 + $0x28] sm:$0xff]
  %v21 = vld [vmem:[%s0 + $0x30] sm:$0xff]
  %v22 = vld [vmem:[%s0 + $0x38] sm:$0xff]
  %v23 = vld [vmem:[%s0 + $0x40] sm:$0xff]
  %v24 = vld [vmem:[%s0 + $0x48] sm:$0xff]
  %v25 = vld [vmem:[%s0 + $0x50] sm:$0xff]
  %v26 = vld [vmem:[%s0 + $0x58] sm:$0xff]
  %v27 = vld [vmem:[%s0 + $0x60] sm:$0xff]
  %v28 = vld [vmem:[%s0 + $0x68] sm:$0xff]
  %v29 = vld [vmem:[%s0 + $0x70] sm:$0xff]
  %v30 = vld [vmem:[%s0 + $0x78] sm:$0xff]
  %v31 = vld [vmem:[%s1] sm:$0xf]
  %v32 = vld [vmem:[%s1 + $0x4] sm:$0xf]
  %v33 = vld [vmem:[%s1 + $0x8] sm:$0xf]
  %v34 = vld [vmem:[%s1 + $0xc] sm:$0xf]
  %v35 = vld [vmem:[%s1 + $0x10] sm:$0xf]
  %v36 = vld [vmem:[%s1 + $0x14] sm:$0xf]
  %v37 = vld [vmem:[%s1 + $0x18] sm:$0xf]
  %v38 = vld [vmem:[%s1 + $0x1c] sm:$0xf]
  %v39 = vld [vmem:[%s1 + $0x20] sm:$0xf]
  %v40 = vld [vmem:[%s1 + $0x24] sm:$0xf]
  %v41 = vld [vmem:[%s1 + $0x28] sm:$0xf]
  %v42 = vld [vmem:[%s1 + $0x2c] sm:$0xf]
  %v43 = vld [vmem:[%s1 + $0x30] sm:$0xf]
  %v44 = vld [vmem:[%s1 + $0x34] sm:$0xf]
  %v45 = vld [vmem:[%s1 + $0x38] sm:$0xf]
  %v46 = vld [vmem:[%s1 + $0x3c] sm:$0xf]
  %v47 = vld [vmem:[%s1 + $0x40] sm:$0xf]
  %v48 = vld [vmem:[%s1 + $0x44] sm:$0xf]
  %v49 = vld [vmem:[%s1 + $0x48] sm:$0xf]
  %v50 = vld [vmem:[%s1 + $0x4c] sm:$0xf]
  %v51 = vld [vmem:[%s1 + $0x50] sm:$0xf]
  %v52 = vld [vmem:[%s1 + $0x54] sm:$0xf]
  %v53 = vld [vmem:[%s1 + $0x58] sm:$0xf]
  %v54 = vld [vmem:[%s1 + $0x5c] sm:$0xf]
  %v55 = vld [vmem:[%s1 + $0x60] sm:$0xf]
  %v56 = vld [vmem:[%s1 + $0x64] sm:$0xf]
  %v57 = vld [vmem:[%s1 + $0x68] sm:$0xf]
  %v58 = vld [vmem:[%s1 + $0x6c] sm:$0xf]
  %v59 = vld [vmem:[%s1 + $0x70] sm:$0xf]
  %v60 = vld [vmem:[%s1 + $0x74] sm:$0xf]
  %v61 = vld [vmem:[%s1 + $0x78] sm:$0xf]
  %v62 = vld [vmem:[%s1 + $0x7c] sm:$0xf]
  %v63 = vld [vmem:[%s2] sm:$0x1]
  %v65 = vlaneseq
  %v66 = vshrl.u32 %v65, 7
  %v67 = vsub.s32 0, %v66
  %v68 = vrot.slane %v63, %v67
  %v86 = vunpack.c.l.b16 %v15
  %v87 = vunpack.c.h.b16 %v15
  %v88 = vunpack.c.l.b16 %v16
  %v89 = vunpack.c.h.b16 %v16
  %v90 = vunpack.c.l.b16 %v17
  %v91 = vunpack.c.h.b16 %v17
  %v92 = vunpack.c.l.b16 %v18
  %v93 = vunpack.c.h.b16 %v18
  %v94 = vunpack.c.l.b16 %v19
  %v95 = vunpack.c.h.b16 %v19
  %v96 = vunpack.c.l.b16 %v20
  %v97 = vunpack.c.h.b16 %v20
  %v98 = vunpack.c.l.b16 %v21
  %v99 = vunpack.c.h.b16 %v21
  %v100 = vunpack.c.l.b16 %v22
  %v101 = vunpack.c.h.b16 %v22
  %v102 = vunpack.c.l.b16 %v23
  %v103 = vunpack.c.h.b16 %v23
  %v104 = vunpack.c.l.b16 %v24
  %v105 = vunpack.c.h.b16 %v24
  %v106 = vunpack.c.l.b16 %v25
  %v107 = vunpack.c.h.b16 %v25
  %v108 = vunpack.c.l.b16 %v26
  %v109 = vunpack.c.h.b16 %v26
  %v110 = vunpack.c.l.b16 %v27
  %v111 = vunpack.c.h.b16 %v27
  %v112 = vunpack.c.l.b16 %v28
  %v113 = vunpack.c.h.b16 %v28
  %v114 = vunpack.c.l.b16 %v29
  %v115 = vunpack.c.h.b16 %v29
  %v116 = vunpack.c.l.b16 %v30
  %v117 = vunpack.c.h.b16 %v30
  %v118 = vpack.c.b16 %v88, %v86
  %v119 = vpack.c.b16 %v89, %v87
  %v120 = vpack.c.b16 %v92, %v90
  %v121 = vpack.c.b16 %v93, %v91
  %v122 = vpack.c.b16 %v96, %v94
  %v123 = vpack.c.b16 %v97, %v95
  %v124 = vpack.c.b16 %v100, %v98
  %v125 = vpack.c.b16 %v101, %v99
  %v126 = vpack.c.b16 %v104, %v102
  %v127 = vpack.c.b16 %v105, %v103
  %v128 = vpack.c.b16 %v108, %v106
  %v129 = vpack.c.b16 %v109, %v107
  %v130 = vpack.c.b16 %v112, %v110
  %v131 = vpack.c.b16 %v113, %v111
  %v132 = vpack.c.b16 %v116, %v114
  %v133 = vpack.c.b16 %v117, %v115
  %v182 = vunpack.c.l.b16 %v31
  %v183 = vunpack.c.l.b16 %v32
  %v184 = vunpack.c.l.b16 %v33
  %v185 = vunpack.c.l.b16 %v34
  %v186 = vunpack.c.l.b16 %v35
  %v187 = vunpack.c.l.b16 %v36
  %v188 = vunpack.c.l.b16 %v37
  %v189 = vunpack.c.l.b16 %v38
  %v190 = vunpack.c.l.b16 %v39
  %v191 = vunpack.c.l.b16 %v40
  %v192 = vunpack.c.l.b16 %v41
  %v193 = vunpack.c.l.b16 %v42
  %v194 = vunpack.c.l.b16 %v43
  %v195 = vunpack.c.l.b16 %v44
  %v196 = vunpack.c.l.b16 %v45
  %v197 = vunpack.c.l.b16 %v46
  %v198 = vunpack.c.l.b16 %v47
  %v199 = vunpack.c.l.b16 %v48
  %v200 = vunpack.c.l.b16 %v49
  %v201 = vunpack.c.l.b16 %v50
  %v202 = vunpack.c.l.b16 %v51
  %v203 = vunpack.c.l.b16 %v52
  %v204 = vunpack.c.l.b16 %v53
  %v205 = vunpack.c.l.b16 %v54
  %v206 = vunpack.c.l.b16 %v55
  %v207 = vunpack.c.l.b16 %v56
  %v208 = vunpack.c.l.b16 %v57
  %v209 = vunpack.c.l.b16 %v58
  %v210 = vunpack.c.l.b16 %v59
  %v211 = vunpack.c.l.b16 %v60
  %v212 = vunpack.c.l.b16 %v61
  %v213 = vunpack.c.l.b16 %v62
  %v214 = vpack.c.b16 %v183, %v182
  %v215 = vpack.c.b16 %v185, %v184
  %v216 = vpack.c.b16 %v187, %v186
  %v217 = vpack.c.b16 %v189, %v188
  %v218 = vpack.c.b16 %v191, %v190
  %v219 = vpack.c.b16 %v193, %v192
  %v220 = vpack.c.b16 %v195, %v194
  %v221 = vpack.c.b16 %v197, %v196
  %v222 = vpack.c.b16 %v199, %v198
  %v223 = vpack.c.b16 %v201, %v200
  %v224 = vpack.c.b16 %v203, %v202
  %v225 = vpack.c.b16 %v205, %v204
  %v226 = vpack.c.b16 %v207, %v206
  %v227 = vpack.c.b16 %v209, %v208
  %v228 = vpack.c.b16 %v211, %v210
  %v229 = vpack.c.b16 %v213, %v212
  %246 = vmatprep.subr.bf16.mxu0 0
  %247 = vmatpush1.bf16.msra.mxu0 %v214
  %248 = vmatprep.subr.bf16.mxu0 0
  %249 = vmatpush1.bf16.msra.mxu0 %v215
  %250 = vmatprep.subr.bf16.mxu0 0
  %251 = vmatpush1.bf16.msra.mxu0 %v216
  %252 = vmatprep.subr.bf16.mxu0 0
  %253 = vmatpush1.bf16.msra.mxu0 %v217
  %254 = vmatprep.subr.bf16.mxu0 0
  %255 = vmatpush1.bf16.msra.mxu0 %v218
  %256 = vmatprep.subr.bf16.mxu0 0
  %257 = vmatpush1.bf16.msra.mxu0 %v219
  %258 = vmatprep.subr.bf16.mxu0 0
  %259 = vmatpush1.bf16.msra.mxu0 %v220
  %260 = vmatprep.subr.bf16.mxu0 0
  %261 = vmatpush1.bf16.msra.mxu0 %v221
  %262 = vmatprep.subr.bf16.mxu0 0
  %263 = vmatpush1.bf16.msra.mxu0 %v222
  %264 = vmatprep.subr.bf16.mxu0 0
  %265 = vmatpush1.bf16.msra.mxu0 %v223
  %266 = vmatprep.subr.bf16.mxu0 0
  %267 = vmatpush1.bf16.msra.mxu0 %v224
  %268 = vmatprep.subr.bf16.mxu0 0
  %269 = vmatpush1.bf16.msra.mxu0 %v225
  %270 = vmatprep.subr.bf16.mxu0 0
  %271 = vmatpush1.bf16.msra.mxu0 %v226
  %272 = vmatprep.subr.bf16.mxu0 0
  %273 = vmatpush1.bf16.msra.mxu0 %v227
  %274 = vmatprep.subr.bf16.mxu0 0
  %275 = vmatpush1.bf16.msra.mxu0 %v228
  %276 = vmatprep.subr.bf16.mxu0 0
  %277 = vmatpush1.bf16.msra.mxu0 %v229
  %278 = vmatprep.mubr.bf16.mxu0 %v119
  %279 = vmatmul.mubr.bf16.gmra.mrb[0].mxu0 %v118
  %v280 = vpop.f32.mrb[0].mxu0
  %v281 = vadd.f32 %v68, %v280
  %v282 = vpop.f32.mrb[0].mxu0
  %v283 = vpop.f32.mrb[0].mxu0
  %v284 = vadd.f32 %v68, %v283
  %v285 = vpop.f32.mrb[0].mxu0
  %286 = vmatprep.mubr.bf16.mxu0 %v121
  %287 = vmatmul.mubr.bf16.gmra.mrb[0].mxu0 %v120
  %v288 = vpop.f32.mrb[0].mxu0
  %v289 = vadd.f32 %v68, %v288
  %v290 = vpop.f32.mrb[0].mxu0
  %v291 = vpop.f32.mrb[0].mxu0
  %v292 = vadd.f32 %v68, %v291
  %v293 = vpop.f32.mrb[0].mxu0
  %294 = vmatprep.mubr.bf16.mxu0 %v123
  %295 = vmatmul.mubr.bf16.gmra.mrb[0].mxu0 %v122
  %v296 = vpop.f32.mrb[0].mxu0
  %v297 = vadd.f32 %v68, %v296
  %v298 = vpop.f32.mrb[0].mxu0
  %v299 = vpop.f32.mrb[0].mxu0
  %v300 = vadd.f32 %v68, %v299
  %v301 = vpop.f32.mrb[0].mxu0
  %302 = vmatprep.mubr.bf16.mxu0 %v125
  %303 = vmatmul.mubr.bf16.gmra.mrb[0].mxu0 %v124
  %v304 = vpop.f32.mrb[0].mxu0
  %v305 = vadd.f32 %v68, %v304
  %v306 = vpop.f32.mrb[0].mxu0
  %v307 = vpop.f32.mrb[0].mxu0
  %v308 = vadd.f32 %v68, %v307
  %v309 = vpop.f32.mrb[0].mxu0
  %310 = vmatprep.mubr.bf16.mxu0 %v127
  %311 = vmatmul.mubr.bf16.gmra.mrb[0].mxu0 %v126
  %v312 = vpop.f32.mrb[0].mxu0
  %v313 = vadd.f32 %v68, %v312
  %v314 = vpop.f32.mrb[0].mxu0
  %v315 = vpop.f32.mrb[0].mxu0
  %v316 = vadd.f32 %v68, %v315
  %v317 = vpop.f32.mrb[0].mxu0
  %318 = vmatprep.mubr.bf16.mxu0 %v129
  %319 = vmatmul.mubr.bf16.gmra.mrb[0].mxu0 %v128
  %v320 = vpop.f32.mrb[0].mxu0
  %v321 = vadd.f32 %v68, %v320
  %v322 = vpop.f32.mrb[0].mxu0
  %v323 = vpop.f32.mrb[0].mxu0
  %v324 = vadd.f32 %v68, %v323
  %v325 = vpop.f32.mrb[0].mxu0
  %326 = vmatprep.mubr.bf16.mxu0 %v131
  %327 = vmatmul.mubr.bf16.gmra.mrb[0].mxu0 %v130
  %v328 = vpop.f32.mrb[0].mxu0
  %v329 = vadd.f32 %v68, %v328
  %v330 = vpop.f32.mrb[0].mxu0
  %v331 = vpop.f32.mrb[0].mxu0
  %v332 = vadd.f32 %v68, %v331
  %v333 = vpop.f32.mrb[0].mxu0
  %334 = vmatprep.mubr.bf16.mxu0 %v133
  %335 = vmatmul.mubr.bf16.gmra.mrb[0].mxu0 %v132
  %v336 = vpop.f32.mrb[0].mxu0
  %v337 = vadd.f32 %v68, %v336
  %v338 = vpop.f32.mrb[0].mxu0
  %v339 = vpop.f32.mrb[0].mxu0
  %v340 = vadd.f32 %v68, %v339
  %v341 = vpop.f32.mrb[0].mxu0
  %342 = vdwg.mxu0
  %v343 = vmax.f32 %v281, 0.0
  %v344 = vmax.f32 %v284, 0.0
  %v345 = vmax.f32 %v289, 0.0
  %v346 = vmax.f32 %v292, 0.0
  %v347 = vmax.f32 %v297, 0.0
  %v348 = vmax.f32 %v300, 0.0
  %v349 = vmax.f32 %v305, 0.0
  %v350 = vmax.f32 %v308, 0.0
  %v351 = vmax.f32 %v313, 0.0
  %v352 = vmax.f32 %v316, 0.0
  %v353 = vmax.f32 %v321, 0.0
  %v354 = vmax.f32 %v324, 0.0
  %v355 = vmax.f32 %v329, 0.0
  %v356 = vmax.f32 %v332, 0.0
  %v357 = vmax.f32 %v337, 0.0
  %v358 = vmax.f32 %v340, 0.0
  %v359 = vpack.c.bf16 %v344, %v343
  %v360 = vpack.c.bf16 %v346, %v345
  %v361 = vpack.c.bf16 %v348, %v347
  %v362 = vpack.c.bf16 %v350, %v349
  %v363 = vpack.c.bf16 %v352, %v351
  %v364 = vpack.c.bf16 %v354, %v353
  %v365 = vpack.c.bf16 %v356, %v355
  %v366 = vpack.c.bf16 %v358, %v357
  %v375 = vunpack.c.l.b16 %v359
  %v376 = vunpack.c.h.b16 %v359
  %v377 = vunpack.c.l.b16 %v360
  %v378 = vunpack.c.h.b16 %v360
  %v379 = vunpack.c.l.b16 %v361
  %v380 = vunpack.c.h.b16 %v361
  %v381 = vunpack.c.l.b16 %v362
  %v382 = vunpack.c.h.b16 %v362
  %v383 = vunpack.c.l.b16 %v363
  %v384 = vunpack.c.h.b16 %v363
  %v385 = vunpack.c.l.b16 %v364
  %v386 = vunpack.c.h.b16 %v364
  %v387 = vunpack.c.l.b16 %v365
  %v388 = vunpack.c.h.b16 %v365
  %v389 = vunpack.c.l.b16 %v366
  %v390 = vunpack.c.h.b16 %v366
  %v391 = vpack.c.b16 %v375, %v375
  %v392 = vpack.c.b16 %v376, %v376
  %v393 = vpack.c.b16 %v377, %v377
  %v394 = vpack.c.b16 %v378, %v378
  %v395 = vpack.c.b16 %v379, %v379
  %v396 = vpack.c.b16 %v380, %v380
  %v397 = vpack.c.b16 %v381, %v381
  %v398 = vpack.c.b16 %v382, %v382
  %v399 = vpack.c.b16 %v383, %v383
  %v400 = vpack.c.b16 %v384, %v384
  %v401 = vpack.c.b16 %v385, %v385
  %v402 = vpack.c.b16 %v386, %v386
  %v403 = vpack.c.b16 %v387, %v387
  %v404 = vpack.c.b16 %v388, %v388
  %v405 = vpack.c.b16 %v389, %v389
  %v406 = vpack.c.b16 %v390, %v390
  %423 = vst [vmem:[%s3] sm:$0xf] %v391
  %424 = vst [vmem:[%s3 + $0x4] sm:$0xf] %v392
  %425 = vst [vmem:[%s3 + $0x8] sm:$0xf] %v393
  %426 = vst [vmem:[%s3 + $0xc] sm:$0xf] %v394
  %427 = vst [vmem:[%s3 + $0x10] sm:$0xf] %v395
  %428 = vst [vmem:[%s3 + $0x14] sm:$0xf] %v396
  %429 = vst [vmem:[%s3 + $0x18] sm:$0xf] %v397
  %430 = vst [vmem:[%s3 + $0x1c] sm:$0xf] %v398
  %431 = vst [vmem:[%s3 + $0x20] sm:$0xf] %v399
  %432 = vst [vmem:[%s3 + $0x24] sm:$0xf] %v400
  %433 = vst [vmem:[%s3 + $0x28] sm:$0xf] %v401
  %434 = vst [vmem:[%s3 + $0x2c] sm:$0xf] %v402
  %435 = vst [vmem:[%s3 + $0x30] sm:$0xf] %v403
  %436 = vst [vmem:[%s3 + $0x34] sm:$0xf] %v404
  %437 = vst [vmem:[%s3 + $0x38] sm:$0xf] %v405
  %438 = vst [vmem:[%s3 + $0x3c] sm:$0xf] %v406
  // Predicated region
  $region14: #{_lambda_.3} parent=0 // pred_check
    _
  $region15: #{_lambda_.3} parent=0 // pred_check_branch
    %440 = sbr.rel (0) target = $region17
  $region16: #{_lambda_.3} parent=0 // pred_region
    _
  $region17: #{_lambda_.3} parent=0 // pred_fallthru
    _
  // Predicated region
  $region18: #{_lambda_.3} parent=0 // pred_check
    _
  $region19: #{_lambda_.3} parent=0 // pred_check_branch
    %442 = sbr.rel (0) target = $region21
  $region20: #{_lambda_.3} parent=0 // pred_region
    _
  $region21: #{_lambda_.3} parent=0 // pred_fallthru
    _

// kernel: _lambda_.4
$region0: #{_lambda_.4}
  #allocation0 [shape = 'u32[]', space=smem, size = 0x4, offset = 0x4, fixed_abs, tag = 'smem constant byte address 0x4 - core index']
  #allocation1 [shape = 'u32[144,128]{1,0:T(1,128)}', space=vmem, size = 0x12000, scoped, tag = 'internal scratch']
  %s0 = inlined_call_operand.vmem [shape: bf16[32,256], index: 0, kind: input, shape index: {}]
  %s1 = inlined_call_operand.vmem [shape: bf16[256,128], index: 1, kind: input, shape index: {}]
  %s2 = inlined_call_operand.vmem [shape: f32[1,128], index: 2, kind: input, shape index: {}]
  %s3 = inlined_call_operand.vmem [shape: bf16[32,128], index: 3, kind: output, shape index: {}]
  %s4 = sld [smem:[#allocation0]]
  $region22: #{_lambda_.4} parent=0
    _
  %s6 = ssub.s32 1, %s4
  %s7 = scalar_select 0, %s6, %s4
  // Predicated region
  $region2: #{_lambda_.4} parent=0 // pred_check
    _
  $region3: #{_lambda_.4} parent=0 // pred_check_branch
    %9 = sbr.rel (0) target = $region5
  $region4: #{_lambda_.4} parent=0 // pred_region
    _
  $region5: #{_lambda_.4} parent=0 // pred_fallthru
    _
  // Predicated region
  $region6: #{_lambda_.4} parent=0 // pred_check
    _
  $region7: #{_lambda_.4} parent=0 // pred_check_branch
    %11 = sbr.rel (0) target = $region9
  $region8: #{_lambda_.4} parent=0 // pred_region
    _
  $region9: #{_lambda_.4} parent=0 // pred_fallthru
    _
  // Predicated region
  $region10: #{_lambda_.4} parent=0 // pred_check
    _
  $region11: #{_lambda_.4} parent=0 // pred_check_branch
    %13 = sbr.rel (0) target = $region13
  $region12: #{_lambda_.4} parent=0 // pred_region
    _
  $region13: #{_lambda_.4} parent=0 // pred_fallthru
    _
  %v15 = vld [vmem:[%s0] sm:$0xff]
  %v16 = vld [vmem:[%s0 + $0x8] sm:$0xff]
  %v17 = vld [vmem:[%s0 + $0x10] sm:$0xff]
  %v18 = vld [vmem:[%s0 + $0x18] sm:$0xff]
  %v19 = vld [vmem:[%s1] sm:$0xf]
  %v20 = vld [vmem:[%s1 + $0x4] sm:$0xf]
  %v21 = vld [vmem:[%s1 + $0x8] sm:$0xf]
  %v22 = vld [vmem:[%s1 + $0xc] sm:$0xf]
  %v23 = vld [vmem:[%s1 + $0x10] sm:$0xf]
  %v24 = vld [vmem:[%s1 + $0x14] sm:$0xf]
  %v25 = vld [vmem:[%s1 + $0x18] sm:$0xf]
  %v26 = vld [vmem:[%s1 + $0x1c] sm:$0xf]
  %v27 = vld [vmem:[%s1 + $0x20] sm:$0xf]
  %v28 = vld [vmem:[%s1 + $0x24] sm:$0xf]
  %v29 = vld [vmem:[%s1 + $0x28] sm:$0xf]
  %v30 = vld [vmem:[%s1 + $0x2c] sm:$0xf]
  %v31 = vld [vmem:[%s1 + $0x30] sm:$0xf]
  %v32 = vld [vmem:[%s1 + $0x34] sm:$0xf]
  %v33 = vld [vmem:[%s1 + $0x38] sm:$0xf]
  %v34 = vld [vmem:[%s1 + $0x3c] sm:$0xf]
  %v35 = vld [vmem:[%s1 + $0x40] sm:$0xf]
  %v36 = vld [vmem:[%s1 + $0x44] sm:$0xf]
  %v37 = vld [vmem:[%s1 + $0x48] sm:$0xf]
  %v38 = vld [vmem:[%s1 + $0x4c] sm:$0xf]
  %v39 = vld [vmem:[%s1 + $0x50] sm:$0xf]
  %v40 = vld [vmem:[%s1 + $0x54] sm:$0xf]
  %v41 = vld [vmem:[%s1 + $0x58] sm:$0xf]
  %v42 = vld [vmem:[%s1 + $0x5c] sm:$0xf]
  %v43 = vld [vmem:[%s1 + $0x60] sm:$0xf]
  %v44 = vld [vmem:[%s1 + $0x64] sm:$0xf]
  %v45 = vld [vmem:[%s1 + $0x68] sm:$0xf]
  %v46 = vld [vmem:[%s1 + $0x6c] sm:$0xf]
  %v47 = vld [vmem:[%s1 + $0x70] sm:$0xf]
  %v48 = vld [vmem:[%s1 + $0x74] sm:$0xf]
  %v49 = vld [vmem:[%s1 + $0x78] sm:$0xf]
  %v50 = vld [vmem:[%s1 + $0x7c] sm:$0xf]
  %v51 = vld [vmem:[%s2] sm:$0x1]
  %v53 = vlaneseq
  %v54 = vshrl.u32 %v53, 7
  %v55 = vsub.s32 0, %v54
  %v56 = vrot.slane %v51, %v55
  %v62 = vunpack.c.l.b16 %v15
  %v63 = vunpack.c.h.b16 %v15
  %v64 = vunpack.c.l.b16 %v16
  %v65 = vunpack.c.h.b16 %v16
  %v66 = vunpack.c.l.b16 %v17
  %v67 = vunpack.c.h.b16 %v17
  %v68 = vunpack.c.l.b16 %v18
  %v69 = vunpack.c.h.b16 %v18
  %v70 = vpack.c.b16 %v64, %v62
  %v71 = vpack.c.b16 %v65, %v63
  %v72 = vpack.c.b16 %v68, %v66
  %v73 = vpack.c.b16 %v69, %v67
  %v110 = vunpack.c.l.b16 %v19
  %v111 = vunpack.c.l.b16 %v20
  %v112 = vunpack.c.l.b16 %v21
  %v113 = vunpack.c.l.b16 %v22
  %v114 = vunpack.c.l.b16 %v23
  %v115 = vunpack.c.l.b16 %v24
  %v116 = vunpack.c.l.b16 %v25
  %v117 = vunpack.c.l.b16 %v26
  %v118 = vunpack.c.l.b16 %v27
  %v119 = vunpack.c.l.b16 %v28
  %v120 = vunpack.c.l.b16 %v29
  %v121 = vunpack.c.l.b16 %v30
  %v122 = vunpack.c.l.b16 %v31
  %v123 = vunpack.c.l.b16 %v32
  %v124 = vunpack.c.l.b16 %v33
  %v125 = vunpack.c.l.b16 %v34
  %v126 = vunpack.c.l.b16 %v35
  %v127 = vunpack.c.l.b16 %v36
  %v128 = vunpack.c.l.b16 %v37
  %v129 = vunpack.c.l.b16 %v38
  %v130 = vunpack.c.l.b16 %v39
  %v131 = vunpack.c.l.b16 %v40
  %v132 = vunpack.c.l.b16 %v41
  %v133 = vunpack.c.l.b16 %v42
  %v134 = vunpack.c.l.b16 %v43
  %v135 = vunpack.c.l.b16 %v44
  %v136 = vunpack.c.l.b16 %v45
  %v137 = vunpack.c.l.b16 %v46
  %v138 = vunpack.c.l.b16 %v47
  %v139 = vunpack.c.l.b16 %v48
  %v140 = vunpack.c.l.b16 %v49
  %v141 = vunpack.c.l.b16 %v50
  %v142 = vpack.c.b16 %v111, %v110
  %v143 = vpack.c.b16 %v113, %v112
  %v144 = vpack.c.b16 %v115, %v114
  %v145 = vpack.c.b16 %v117, %v116
  %v146 = vpack.c.b16 %v119, %v118
  %v147 = vpack.c.b16 %v121, %v120
  %v148 = vpack.c.b16 %v123, %v122
  %v149 = vpack.c.b16 %v125, %v124
  %v150 = vpack.c.b16 %v127, %v126
  %v151 = vpack.c.b16 %v129, %v128
  %v152 = vpack.c.b16 %v131, %v130
  %v153 = vpack.c.b16 %v133, %v132
  %v154 = vpack.c.b16 %v135, %v134
  %v155 = vpack.c.b16 %v137, %v136
  %v156 = vpack.c.b16 %v139, %v138
  %v157 = vpack.c.b16 %v141, %v140
  %174 = vmatprep.subr.bf16.mxu0 0
  %175 = vmatpush1.bf16.msra.mxu0 %v142
  %176 = vmatprep.subr.bf16.mxu0 0
  %177 = vmatpush1.bf16.msra.mxu0 %v143
  %178 = vmatprep.subr.bf16.mxu0 0
  %179 = vmatpush1.bf16.msra.mxu0 %v144
  %180 = vmatprep.subr.bf16.mxu0 0
  %181 = vmatpush1.bf16.msra.mxu0 %v145
  %182 = vmatprep.subr.bf16.mxu0 0
  %183 = vmatpush1.bf16.msra.mxu0 %v146
  %184 = vmatprep.subr.bf16.mxu0 0
  %185 = vmatpush1.bf16.msra.mxu0 %v147
  %186 = vmatprep.subr.bf16.mxu0 0
  %187 = vmatpush1.bf16.msra.mxu0 %v148
  %188 = vmatprep.subr.bf16.mxu0 0
  %189 = vmatpush1.bf16.msra.mxu0 %v149
  %190 = vmatprep.subr.bf16.mxu0 0
  %191 = vmatpush1.bf16.msra.mxu0 %v150
  %192 = vmatprep.subr.bf16.mxu0 0
  %193 = vmatpush1.bf16.msra.mxu0 %v151
  %194 = vmatprep.subr.bf16.mxu0 0
  %195 = vmatpush1.bf16.msra.mxu0 %v152
  %196 = vmatprep.subr.bf16.mxu0 0
  %197 = vmatpush1.bf16.msra.mxu0 %v153
  %198 = vmatprep.subr.bf16.mxu0 0
  %199 = vmatpush1.bf16.msra.mxu0 %v154
  %200 = vmatprep.subr.bf16.mxu0 0
  %201 = vmatpush1.bf16.msra.mxu0 %v155
  %202 = vmatprep.subr.bf16.mxu0 0
  %203 = vmatpush1.bf16.msra.mxu0 %v156
  %204 = vmatprep.subr.bf16.mxu0 0
  %205 = vmatpush1.bf16.msra.mxu0 %v157
  %206 = vmatprep.mubr.bf16.mxu0 %v71
  %207 = vmatmul.mubr.bf16.gmra.mrb[0].mxu0 %v70
  %v208 = vpop.f32.mrb[0].mxu0
  %v209 = vadd.f32 %v56, %v208
  %v210 = vpop.f32.mrb[0].mxu0
  %v211 = vpop.f32.mrb[0].mxu0
  %v212 = vadd.f32 %v56, %v211
  %v213 = vpop.f32.mrb[0].mxu0
  %214 = vmatprep.mubr.bf16.mxu0 %v73
  %215 = vmatmul.mubr.bf16.gmra.mrb[0].mxu0 %v72
  %v216 = vpop.f32.mrb[0].mxu0
  %v217 = vadd.f32 %v56, %v216
  %v218 = vpop.f32.mrb[0].mxu0
  %v219 = vpop.f32.mrb[0].mxu0
  %v220 = vadd.f32 %v56, %v219
  %v221 = vpop.f32.mrb[0].mxu0
  %222 = vdwg.mxu0
  %v223 = vmax.f32 %v209, 0.0
  %v224 = vmax.f32 %v212, 0.0
  %v225 = vmax.f32 %v217, 0.0
  %v226 = vmax.f32 %v220, 0.0
  %v227 = vpack.c.bf16 %v224, %v223
  %v228 = vpack.c.bf16 %v226, %v225
  %v231 = vunpack.c.l.b16 %v227
  %v232 = vunpack.c.h.b16 %v227
  %v233 = vunpack.c.l.b16 %v228
  %v234 = vunpack.c.h.b16 %v228
  %v235 = vpack.c.b16 %v231, %v231
  %v236 = vpack.c.b16 %v232, %v232
  %v237 = vpack.c.b16 %v233, %v233
  %v238 = vpack.c.b16 %v234, %v234
  %243 = vst [vmem:[%s3] sm:$0xf] %v235
  %244 = vst [vmem:[%s3 + $0x4] sm:$0xf] %v236
  %245 = vst [vmem:[%s3 + $0x8] sm:$0xf] %v237
  %246 = vst [vmem:[%s3 + $0xc] sm:$0xf] %v238
  // Predicated region
  $region14: #{_lambda_.4} parent=0 // pred_check
    _
  $region15: #{_lambda_.4} parent=0 // pred_check_branch
    %248 = sbr.rel (0) target = $region17
  $region16: #{_lambda_.4} parent=0 // pred_region
    _
  $region17: #{_lambda_.4} parent=0 // pred_fallthru
    _
  // Predicated region
  $region18: #{_lambda_.4} parent=0 // pred_check
    _
  $region19: #{_lambda_.4} parent=0 // pred_check_branch
    %250 = sbr.rel (0) target = $region21
  $region20: #{_lambda_.4} parent=0 // pred_region
    _
  $region21: #{_lambda_.4} parent=0 // pred_fallthru
    _

// kernel: _lambda_.5
$region0: #{_lambda_.5}
  #allocation0 [shape = 'u32[]', space=smem, size = 0x4, offset = 0x4, fixed_abs, tag = 'smem constant byte address 0x4 - core index']
  #allocation1 [shape = 'u32[144,128]{1,0:T(1,128)}', space=vmem, size = 0x12000, scoped, tag = 'internal scratch']
  %s0 = inlined_call_operand.vmem [shape: bf16[16,384], index: 0, kind: input, shape index: {}]
  %s1 = inlined_call_operand.vmem [shape: bf16[384,128], index: 1, kind: input, shape index: {}]
  %s2 = inlined_call_operand.vmem [shape: f32[1,128], index: 2, kind: input, shape index: {}]
  %s3 = inlined_call_operand.vmem [shape: bf16[16,128], index: 3, kind: output, shape index: {}]
  %s4 = sld [smem:[#allocation0]]
  $region22: #{_lambda_.5} parent=0
    _
  %s6 = ssub.s32 1, %s4
  %s7 = scalar_select 0, %s6, %s4
  // Predicated region
  $region2: #{_lambda_.5} parent=0 // pred_check
    _
  $region3: #{_lambda_.5} parent=0 // pred_check_branch
    %9 = sbr.rel (0) target = $region5
  $region4: #{_lambda_.5} parent=0 // pred_region
    _
  $region5: #{_lambda_.5} parent=0 // pred_fallthru
    _
  // Predicated region
  $region6: #{_lambda_.5} parent=0 // pred_check
    _
  $region7: #{_lambda_.5} parent=0 // pred_check_branch
    %11 = sbr.rel (0) target = $region9
  $region8: #{_lambda_.5} parent=0 // pred_region
    _
  $region9: #{_lambda_.5} parent=0 // pred_fallthru
    _
  // Predicated region
  $region10: #{_lambda_.5} parent=0 // pred_check
    _
  $region11: #{_lambda_.5} parent=0 // pred_check_branch
    %13 = sbr.rel (0) target = $region13
  $region12: #{_lambda_.5} parent=0 // pred_region
    _
  $region13: #{_lambda_.5} parent=0 // pred_fallthru
    _
  %v15 = vld [vmem:[%s0] sm:$0xff]
  %v16 = vld [vmem:[%s0 + $0x8] sm:$0xf]
  %v17 = vld [vmem:[%s0 + $0xc] sm:$0xff]
  %v18 = vld [vmem:[%s0 + $0x14] sm:$0xf]
  %v19 = vld [vmem:[%s1] sm:$0xf]
  %v20 = vld [vmem:[%s1 + $0x4] sm:$0xf]
  %v21 = vld [vmem:[%s1 + $0x8] sm:$0xf]
  %v22 = vld [vmem:[%s1 + $0xc] sm:$0xf]
  %v23 = vld [vmem:[%s1 + $0x10] sm:$0xf]
  %v24 = vld [vmem:[%s1 + $0x14] sm:$0xf]
  %v25 = vld [vmem:[%s1 + $0x18] sm:$0xf]
  %v26 = vld [vmem:[%s1 + $0x1c] sm:$0xf]
  %v27 = vld [vmem:[%s1 + $0x20] sm:$0xf]
  %v28 = vld [vmem:[%s1 + $0x24] sm:$0xf]
  %v29 = vld [vmem:[%s1 + $0x28] sm:$0xf]
  %v30 = vld [vmem:[%s1 + $0x2c] sm:$0xf]
  %v31 = vld [vmem:[%s1 + $0x30] sm:$0xf]
  %v32 = vld [vmem:[%s1 + $0x34] sm:$0xf]
  %v33 = vld [vmem:[%s1 + $0x38] sm:$0xf]
  %v34 = vld [vmem:[%s1 + $0x3c] sm:$0xf]
  %v35 = vld [vmem:[%s1 + $0x40] sm:$0xf]
  %v36 = vld [vmem:[%s1 + $0x44] sm:$0xf]
  %v37 = vld [vmem:[%s1 + $0x48] sm:$0xf]
  %v38 = vld [vmem:[%s1 + $0x4c] sm:$0xf]
  %v39 = vld [vmem:[%s1 + $0x50] sm:$0xf]
  %v40 = vld [vmem:[%s1 + $0x54] sm:$0xf]
  %v41 = vld [vmem:[%s1 + $0x58] sm:$0xf]
  %v42 = vld [vmem:[%s1 + $0x5c] sm:$0xf]
  %v43 = vld [vmem:[%s1 + $0x60] sm:$0xf]
  %v44 = vld [vmem:[%s1 + $0x64] sm:$0xf]
  %v45 = vld [vmem:[%s1 + $0x68] sm:$0xf]
  %v46 = vld [vmem:[%s1 + $0x6c] sm:$0xf]
  %v47 = vld [vmem:[%s1 + $0x70] sm:$0xf]
  %v48 = vld [vmem:[%s1 + $0x74] sm:$0xf]
  %v49 = vld [vmem:[%s1 + $0x78] sm:$0xf]
  %v50 = vld [vmem:[%s1 + $0x7c] sm:$0xf]
  %v51 = vld [vmem:[%s1 + $0x80] sm:$0xf]
  %v52 = vld [vmem:[%s1 + $0x84] sm:$0xf]
  %v53 = vld [vmem:[%s1 + $0x88] sm:$0xf]
  %v54 = vld [vmem:[%s1 + $0x8c] sm:$0xf]
  %v55 = vld [vmem:[%s1 + $0x90] sm:$0xf]
  %v56 = vld [vmem:[%s1 + $0x94] sm:$0xf]
  %v57 = vld [vmem:[%s1 + $0x98] sm:$0xf]
  %v58 = vld [vmem:[%s1 + $0x9c] sm:$0xf]
  %v59 = vld [vmem:[%s1 + $0xa0] sm:$0xf]
  %v60 = vld [vmem:[%s1 + $0xa4] sm:$0xf]
  %v61 = vld [vmem:[%s1 + $0xa8] sm:$0xf]
  %v62 = vld [vmem:[%s1 + $0xac] sm:$0xf]
  %v63 = vld [vmem:[%s1 + $0xb0] sm:$0xf]
  %v64 = vld [vmem:[%s1 + $0xb4] sm:$0xf]
  %v65 = vld [vmem:[%s1 + $0xb8] sm:$0xf]
  %v66 = vld [vmem:[%s1 + $0xbc] sm:$0xf]
  %v67 = vld [vmem:[%s2] sm:$0x1]
  %v69 = vlaneseq
  %v70 = vshrl.u32 %v69, 7
  %v71 = vsub.s32 0, %v70
  %v72 = vrot.slane %v67, %v71
  %v78 = vunpack.c.l.b16 %v15
  %v79 = vunpack.c.h.b16 %v15
  %v80 = vunpack.c.l.b16 %v16
  %v81 = vunpack.c.l.b16 %v17
  %v82 = vunpack.c.h.b16 %v17
  %v83 = vunpack.c.l.b16 %v18
  %v84 = vpack.c.b16 %v81, %v78
  %v85 = vpack.c.b16 %v82, %v79
  %v86 = vpack.c.b16 %v83, %v80
  %v138 = vunpack.c.l.b16 %v19
  %v139 = vunpack.c.l.b16 %v20
  %v140 = vunpack.c.l.b16 %v21
  %v141 = vunpack.c.l.b16 %v22
  %v142 = vunpack.c.l.b16 %v23
  %v143 = vunpack.c.l.b16 %v24
  %v144 = vunpack.c.l.b16 %v25
  %v145 = vunpack.c.l.b16 %v26
  %v146 = vunpack.c.l.b16 %v27
  %v147 = vunpack.c.l.b16 %v28
  %v148 = vunpack.c.l.b16 %v29
  %v149 = vunpack.c.l.b16 %v30
  %v150 = vunpack.c.l.b16 %v31
  %v151 = vunpack.c.l.b16 %v32
  %v152 = vunpack.c.l.b16 %v33
  %v153 = vunpack.c.l.b16 %v34
  %v154 = vunpack.c.l.b16 %v35
  %v155 = vunpack.c.l.b16 %v36
  %v156 = vunpack.c.l.b16 %v37
  %v157 = vunpack.c.l.b16 %v38
  %v158 = vunpack.c.l.b16 %v39
  %v159 = vunpack.c.l.b16 %v40
  %v160 = vunpack.c.l.b16 %v41
  %v161 = vunpack.c.l.b16 %v42
  %v162 = vunpack.c.l.b16 %v43
  %v163 = vunpack.c.l.b16 %v44
  %v164 = vunpack.c.l.b16 %v45
  %v165 = vunpack.c.l.b16 %v46
  %v166 = vunpack.c.l.b16 %v47
  %v167 = vunpack.c.l.b16 %v48
  %v168 = vunpack.c.l.b16 %v49
  %v169 = vunpack.c.l.b16 %v50
  %v170 = vunpack.c.l.b16 %v51
  %v171 = vunpack.c.l.b16 %v52
  %v172 = vunpack.c.l.b16 %v53
  %v173 = vunpack.c.l.b16 %v54
  %v174 = vunpack.c.l.b16 %v55
  %v175 = vunpack.c.l.b16 %v56
  %v176 = vunpack.c.l.b16 %v57
  %v177 = vunpack.c.l.b16 %v58
  %v178 = vunpack.c.l.b16 %v59
  %v179 = vunpack.c.l.b16 %v60
  %v180 = vunpack.c.l.b16 %v61
  %v181 = vunpack.c.l.b16 %v62
  %v182 = vunpack.c.l.b16 %v63
  %v183 = vunpack.c.l.b16 %v64
  %v184 = vunpack.c.l.b16 %v65
  %v185 = vunpack.c.l.b16 %v66
  %v186 = vpack.c.b16 %v139, %v138
  %v187 = vpack.c.b16 %v141, %v140
  %v188 = vpack.c.b16 %v143, %v142
  %v189 = vpack.c.b16 %v145, %v144
  %v190 = vpack.c.b16 %v147, %v146
  %v191 = vpack.c.b16 %v149, %v148
  %v192 = vpack.c.b16 %v151, %v150
  %v193 = vpack.c.b16 %v153, %v152
  %v194 = vpack.c.b16 %v155, %v154
  %v195 = vpack.c.b16 %v157, %v156
  %v196 = vpack.c.b16 %v159, %v158
  %v197 = vpack.c.b16 %v161, %v160
  %v198 = vpack.c.b16 %v163, %v162
  %v199 = vpack.c.b16 %v165, %v164
  %v200 = vpack.c.b16 %v167, %v166
  %v201 = vpack.c.b16 %v169, %v168
  %v202 = vpack.c.b16 %v171, %v170
  %v203 = vpack.c.b16 %v173, %v172
  %v204 = vpack.c.b16 %v175, %v174
  %v205 = vpack.c.b16 %v177, %v176
  %v206 = vpack.c.b16 %v179, %v178
  %v207 = vpack.c.b16 %v181, %v180
  %v208 = vpack.c.b16 %v183, %v182
  %v209 = vpack.c.b16 %v185, %v184
  %234 = vmatprep.subr.bf16.mxu0 0
  %235 = vmatpush1.bf16.msra.mxu0 %v186
  %236 = vmatprep.subr.bf16.mxu0 0
  %237 = vmatpush1.bf16.msra.mxu0 %v187
  %238 = vmatprep.subr.bf16.mxu0 0
  %239 = vmatpush1.bf16.msra.mxu0 %v188
  %240 = vmatprep.subr.bf16.mxu0 0
  %241 = vmatpush1.bf16.msra.mxu0 %v189
  %242 = vmatprep.subr.bf16.mxu0 0
  %243 = vmatpush1.bf16.msra.mxu0 %v190
  %244 = vmatprep.subr.bf16.mxu0 0
  %245 = vmatpush1.bf16.msra.mxu0 %v191
  %246 = vmatprep.subr.bf16.mxu0 0
  %247 = vmatpush1.bf16.msra.mxu0 %v192
  %248 = vmatprep.subr.bf16.mxu0 0
  %249 = vmatpush1.bf16.msra.mxu0 %v193
  %250 = vmatprep.subr.bf16.mxu0 0
  %251 = vmatpush1.bf16.msra.mxu0 %v194
  %252 = vmatprep.subr.bf16.mxu0 0
  %253 = vmatpush1.bf16.msra.mxu0 %v195
  %254 = vmatprep.subr.bf16.mxu0 0
  %255 = vmatpush1.bf16.msra.mxu0 %v196
  %256 = vmatprep.subr.bf16.mxu0 0
  %257 = vmatpush1.bf16.msra.mxu0 %v197
  %258 = vmatprep.subr.bf16.mxu0 0
  %259 = vmatpush1.bf16.msra.mxu0 %v198
  %260 = vmatprep.subr.bf16.mxu0 0
  %261 = vmatpush1.bf16.msra.mxu0 %v199
  %262 = vmatprep.subr.bf16.mxu0 0
  %263 = vmatpush1.bf16.msra.mxu0 %v200
  %264 = vmatprep.subr.bf16.mxu0 0
  %265 = vmatpush1.bf16.msra.mxu0 %v201
  %266 = vmatprep.mubr.bf16.mxu0 %v85
  %267 = vmatmul.mubr.bf16.gmra.mrb[0].mxu0 %v84
  %v268 = vpop.f32.mrb[0].mxu0
  %v269 = vadd.f32 %v72, %v268
  %v270 = vpop.f32.mrb[0].mxu0
  %v271 = vpop.f32.mrb[0].mxu0
  %v272 = vadd.f32 %v72, %v271
  %v273 = vpop.f32.mrb[0].mxu0
  %274 = vdwg.mxu0
  %275 = vmatprep.subr.bf16.mxu0 0
  %276 = vmatpush1.bf16.msra.mxu0 %v202
  %277 = vmatprep.subr.bf16.mxu0 0
  %278 = vmatpush1.bf16.msra.mxu0 %v203
  %279 = vmatprep.subr.bf16.mxu0 0
  %280 = vmatpush1.bf16.msra.mxu0 %v204
  %281 = vmatprep.subr.bf16.mxu0 0
  %282 = vmatpush1.bf16.msra.mxu0 %v205
  %283 = vmatprep.subr.bf16.mxu0 0
  %284 = vmatpush1.bf16.msra.mxu0 %v206
  %285 = vmatprep.subr.bf16.mxu0 0
  %286 = vmatpush1.bf16.msra.mxu0 %v207
  %287 = vmatprep.subr.bf16.mxu0 0
  %288 = vmatpush1.bf16.msra.mxu0 %v208
  %289 = vmatprep.subr.bf16.mxu0 0
  %290 = vmatpush1.bf16.msra.mxu0 %v209
  %291 = vmatprep.subr.bf16.mxu0 0
  %292 = vmatpush1.bf16.msra.mxu0 0
  %293 = vmatprep.subr.bf16.mxu0 0
  %294 = vmatpush1.bf16.msra.mxu0 0
  %295 = vmatprep.subr.bf16.mxu0 0
  %296 = vmatpush1.bf16.msra.mxu0 0
  %297 = vmatprep.subr.bf16.mxu0 0
  %298 = vmatpush1.bf16.msra.mxu0 0
  %299 = vmatprep.subr.bf16.mxu0 0
  %300 = vmatpush1.bf16.msra.mxu0 0
  %301 = vmatprep.subr.bf16.mxu0 0
  %302 = vmatpush1.bf16.msra.mxu0 0
  %303 = vmatprep.subr.bf16.mxu0 0
  %304 = vmatpush1.bf16.msra.mxu0 0
  %305 = vmatprep.subr.bf16.mxu0 0
  %306 = vmatpush1.bf16.msra.mxu0 0
  %307 = vmatprep.mubr.bf16.mxu0 0
  %308 = vmatmul.mubr.bf16.gmra.mrb[0].mxu0 %v86
  %v309 = vpop.f32.mrb[0].mxu0
  %v310 = vadd.f32 %v269, %v309
  %v311 = vpop.f32.mrb[0].mxu0
  %v312 = vpop.f32.mrb[0].mxu0
  %v313 = vadd.f32 %v272, %v312
  %v314 = vpop.f32.mrb[0].mxu0
  %315 = vdwg.mxu0
  %v316 = vmax.f32 %v310, 0.0
  %v317 = vmax.f32 %v313, 0.0
  %v318 = vpack.c.bf16 %v317, %v316
  %v320 = vunpack.c.l.b16 %v318
  %v321 = vunpack.c.h.b16 %v318
  %v322 = vpack.c.b16 %v320, %v320
  %v323 = vpack.c.b16 %v321, %v321
  %326 = vst [vmem:[%s3] sm:$0xf] %v322
  %327 = vst [vmem:[%s3 + $0x4] sm:$0xf] %v323
  // Predicated region
  $region14: #{_lambda_.5} parent=0 // pred_check
    _
  $region15: #{_lambda_.5} parent=0 // pred_check_branch
    %329 = sbr.rel (0) target = $region17
  $region16: #{_lambda_.5} parent=0 // pred_region
    _
  $region17: #{_lambda_.5} parent=0 // pred_fallthru
    _
  // Predicated region
  $region18: #{_lambda_.5} parent=0 // pred_check
    _
  $region19: #{_lambda_.5} parent=0 // pred_check_branch
    %331 = sbr.rel (0) target = $region21
  $region20: #{_lambda_.5} parent=0 // pred_region
    _
  $region21: #{_lambda_.5} parent=0 // pred_fallthru
    _

</llo_original>
